<compile_context>
chip_gen: v6e
topology: v6e:2x2x1
jax: 0.10.0
libtpu: 0.0.40
codegen_flags: <defaults>
</compile_context>

<pallas_src>
import functools

import jax
import jax.numpy as jnp
from jax.experimental import pallas as pl
from jax.experimental.pallas import tpu as pltpu

EPS = 1e-6


def _round_up(x, m):
    return ((x + m - 1) // m) * m


def _detect_tpu():
    """Best-effort hardware query: (num_tensorcores, vmem_capacity_bytes, bf16_eup)."""
    num_cores = 1
    vmem_capacity = 64 * 1024 * 1024          # conservative fallback (v7x per-TC)
    bf16_eup = False
    try:
        info = pltpu.get_tpu_info()
        vmem_capacity = int(getattr(info, "vmem_capacity_bytes", vmem_capacity))
    except Exception:
        pass
    try:
        kind = jax.devices()[0].device_kind.lower()
        bf16_eup = ("v6" in kind) or ("v7" in kind)     # v5e EUP has no bf16
        if "v7" in kind:
            num_cores = 2                                # 2 TensorCores per chip
    except Exception:
        pass
    return num_cores, vmem_capacity, bf16_eup


def _choose_block_rows(n_rows, num_cores, max_block_rows=1024):
    """Largest multiple-of-8 row tile <= max_block_rows.

    On single-TensorCore chips (v5e/v6e) the grid is a serial loop, so never
    split just to get >=2 steps (that only adds ~0.35us/step overhead and
    shrinks the MXU's M).  Only split a single-step grid for megacore (v7x)
    when each TensorCore still gets >=256-row tiles.
    """
    br = min(max_block_rows, _round_up(n_rows, 8))
    if num_cores >= 2 and n_rows >= 512 and br >= n_rows:
        br = max(256, min(br, _round_up(pl.cdiv(n_rows, num_cores), 8)))
    return max(8, br)


# --------------------------------------------------------------------------
# Fused kernel: N x (residual tanh-linear) + final LayerNorm, single store.
# --------------------------------------------------------------------------
def _fused_decoder_kernel(x_ref, w_ref, b_ref, a2_ref, b2_ref, o_ref, *, tanh_bf16):
    n_layers = w_ref.shape[0]
    d = x_ref.shape[-1]

    x = x_ref[...].astype(jnp.float32)

    def apply_layer(xc, w, b):
        h = jnp.dot(xc.astype(jnp.bfloat16), w, preferred_element_type=jnp.float32)
        h = h + b.astype(jnp.float32)
        if tanh_bf16:
            # v6e/v7x EUP runs bf16 transcendentals ~2x faster; v5e stays f32.
            t = jnp.tanh(h.astype(jnp.bfloat16)).astype(jnp.float32)
        else:
            t = jnp.tanh(h)
        return xc + t

    if n_layers <= 8:
        # Few layers: static unroll (full LLO scheduling visibility).
        for layer in range(n_layers):
            x = apply_layer(x, w_ref[layer], b_ref[layer])
    else:
        # Many layers: fori_loop bounds live ranges to one layer's temporaries.
        x = jax.lax.fori_loop(
            0, n_layers, lambda l, xc: apply_layer(xc, w_ref[l], b_ref[l]), x)

    # LayerNorm (torch semantics: mean, UNBIASED std, eps added to std).
    mean = jnp.mean(x, axis=-1, keepdims=True)
    diff = x - mean
    var = jnp.sum(diff * diff, axis=-1, keepdims=True) / (d - 1)
    # Exact per-row divide (O(rows) work, off the critical unit) — no approx
    # reciprocal error in the output.
    inv_std = 1.0 / (jnp.sqrt(var) + EPS)
    y = a2_ref[...].astype(jnp.float32) * diff * inv_std + b2_ref[...].astype(jnp.float32)

    o_ref[...] = y.astype(o_ref.dtype)


def fused_decoder_forward(x, w_stack, b_stack, a2, b2, *, max_block_rows=1024):
    """x: (B, T, D) f32; w_stack: (N, D, D) bf16; b_stack: (N, 1, D) f32."""
    B, T, D = x.shape
    n_layers = w_stack.shape[0]
    R = B * T
    x2d = x.reshape(R, D)

    num_cores, vmem_capacity, bf16_eup = _detect_tpu()
    block_rows = _choose_block_rows(R, num_cores, max_block_rows)

    # Grid sized with cdiv: the ragged last tile (if any) is handled by Pallas'
    # out-of-bounds block clipping/masking — no wrapper-side jnp.pad, which
    # would add a full extra HBM read+write of the activations.
    grid = (pl.cdiv(R, block_rows),)

    # VMEM limit derived from the chip (0.75x capacity), not hard-coded:
    # v5e/v6e (128 MiB) -> ~96 MiB, v7x (64 MiB per TC) -> ~48 MiB.
    vmem_limit = max(32 * 1024 * 1024, int(0.75 * vmem_capacity))

    # TODO(synk): if n_layers*D*D weight bytes ever exceed ~40% of vmem_limit,
    # stream the weight stack with a manual double-buffer instead of keeping
    # it VMEM-resident.
    kernel = functools.partial(_fused_decoder_kernel, tanh_bf16=bf16_eup)

    def run(single_buffer_consts):
        def const_spec(shape):
            n = len(shape)

            def zero_map(i):
                return (0,) * n

            if single_buffer_consts:
                # Constant index_map => keep ONE resident copy instead of the
                # default double buffer (halves resident-weight VMEM).
                return pl.BlockSpec(shape, zero_map, pipeline_mode=pl.Buffered(1))
            return pl.BlockSpec(shape, zero_map)

        return pl.pallas_call(
            kernel,
            out_shape=jax.ShapeDtypeStruct((R, D), x.dtype),
            grid_spec=pltpu.PrefetchScalarGridSpec(
                num_scalar_prefetch=0,
                grid=grid,
                in_specs=[
                    pl.BlockSpec((block_rows, D), lambda i: (i, 0)),   # activation tile
                    const_spec((n_layers, D, D)),                      # weights (resident)
                    const_spec((n_layers, 1, D)),                      # biases  (resident)
                    const_spec((1, D)),                                # a2
                    const_spec((1, D)),                                # b2
                ],
                out_specs=pl.BlockSpec((block_rows, D), lambda i: (i, 0)),
            ),
            compiler_params=pltpu.CompilerParams(
                dimension_semantics=("parallel",),
                vmem_limit_bytes=vmem_limit,
            ),
        )(x2d, w_stack, b_stack, a2.reshape(1, D), b2.reshape(1, D))

    try:
        out = jax.block_until_ready(run(single_buffer_consts=True))
    except Exception:
        # TODO(synk): drop this fallback once pl.Buffered(1) on constant-index
        # operands is confirmed on all deployed jax/libtpu versions.
        out = jax.block_until_ready(run(single_buffer_consts=False))

    return out.reshape(B, T, D)


# --------------------------------------------------------------------------
# Decoder: apply N (cloned) layers, then LayerNorm — mirrors the PyTorch module.
# --------------------------------------------------------------------------
class Decoder:
    def __init__(self, d_model, n_layers, key):
        self.d_model = d_model
        self.n_layers = n_layers
        k_w, k_b = jax.random.split(key)
        w_keys = jax.random.split(k_w, n_layers)
        b_keys = jax.random.split(k_b, n_layers)
        # Stacked per-layer params; weights stored bf16 (halves HBM/VMEM bytes,
        # native MXU operand dtype on all generations).
        self.w_stack = jnp.stack([
            jax.random.normal(k, (d_model, d_model), jnp.float32)
            / jnp.sqrt(jnp.float32(d_model))
            for k in w_keys
        ]).astype(jnp.bfloat16)                                   # (N, D, D)
        self.b_stack = jnp.stack([
            0.1 * jax.random.normal(k, (d_model,), jnp.float32) for k in b_keys
        ]).reshape(n_layers, 1, d_model)                          # (N, 1, D) f32
        # LayerNorm params as in the PyTorch __init__.
        self.a2 = jnp.ones((d_model,), jnp.float32)
        self.b2 = jnp.zeros((d_model,), jnp.float32)

    def __call__(self, x, memory, source_mask, target_mask):
        # TODO(synk): the concrete DecoderLayer (self/cross attention over
        # `memory` with `source_mask`/`target_mask`) is not defined in the
        # reference code; a residual tanh-linear Pallas layer stands in.
        return fused_decoder_forward(x, self.w_stack, self.b_stack, self.a2, self.b2)


def _reference(decoder, x, tanh_bf16):
    # Plain-JAX reference of the same math (bf16 matmul operands, f32 accum).
    B, T, D = x.shape
    h = x.reshape(B * T, D).astype(jnp.float32)
    for layer in range(decoder.n_layers):
        w = decoder.w_stack[layer]
        b = decoder.b_stack[layer].astype(jnp.float32)
        z = jnp.dot(h.astype(jnp.bfloat16), w, preferred_element_type=jnp.float32) + b
        if tanh_bf16:
            t = jnp.tanh(z.astype(jnp.bfloat16)).astype(jnp.float32)
        else:
            t = jnp.tanh(z)
        h = h + t
    mean = jnp.mean(h, axis=-1, keepdims=True)
    diff = h - mean
    std = jnp.sqrt(jnp.sum(diff * diff, axis=-1, keepdims=True) / (D - 1))
    y = decoder.a2 * diff / (std + EPS) + decoder.b2
    return y.reshape(B, T, D)


if __name__ == "__main__":
    key = jax.random.PRNGKey(0)
    k_x, k_mem, k_params = jax.random.split(key, 3)

    # d_model=128 keeps the last dim lane-dense (full 128-lane stores).
    B, T, S, D, N = 2, 8, 8, 128, 2
    x = jax.random.normal(k_x, (B, T, D), jnp.float32)
    memory = jax.random.normal(k_mem, (B, S, D), jnp.float32)
    source_mask = jnp.ones((B, 1, T, S), jnp.float32)
    target_mask = jnp.tril(jnp.ones((T, T), jnp.float32))[None, None]

    decoder = Decoder(D, N, k_params)

    out = decoder(x, memory, source_mask, target_mask)
    out = jax.block_until_ready(out)

    _, _, tanh_bf16 = _detect_tpu()
    ref = _reference(decoder, x, tanh_bf16)
    assert out.shape == (B, T, D)
    max_err = float(jnp.max(jnp.abs(out - ref)))
    # Tolerance covers bf16 MXU operands (and bf16 tanh on v6e/v7x).
    assert max_err < 2e-2, f"max abs error {max_err}"

    print("KERNEL_OK")
</pallas_src>

<mosaic_0001>
module attributes {stable_mosaic.version = 11 : i64} {
  func.func @_fused_decoder_kernel(%arg0: i32, %arg1: memref<16x128xf32, #tpu.memory_space<vmem>>, %arg2: memref<2x128x128xbf16, #tpu.memory_space<vmem>>, %arg3: memref<2x1x128xf32, #tpu.memory_space<vmem>>, %arg4: memref<1x128xf32, #tpu.memory_space<vmem>>, %arg5: memref<1x128xf32, #tpu.memory_space<vmem>>, %arg6: memref<16x128xf32, #tpu.memory_space<vmem>>) attributes {dimension_semantics = [#tpu.dimension_semantics<parallel>], iteration_bounds = array<i64: 1>, scalar_prefetch = 0 : i64, scratch_operands = 0 : i64, tpu.core_type = #tpu.core_type<tc>, window_params = [{transform_indices = @transform_0, window_bounds = array<i64: 16, 128>}, {pipeline_mode = #tpu.pipeline_mode<synchronous>, transform_indices = @transform_1, window_bounds = array<i64: 2, 128, 128>}, {pipeline_mode = #tpu.pipeline_mode<synchronous>, transform_indices = @transform_2, window_bounds = array<i64: 2, 1, 128>}, {pipeline_mode = #tpu.pipeline_mode<synchronous>, transform_indices = @transform_3, window_bounds = array<i64: 1, 128>}, {pipeline_mode = #tpu.pipeline_mode<synchronous>, transform_indices = @transform_4, window_bounds = array<i64: 1, 128>}, {transform_indices = @transform_5, window_bounds = array<i64: 16, 128>}]} {
    %c0 = arith.constant 0 : index
    %c0_0 = arith.constant 0 : index
    %0 = vector.load %arg1[%c0, %c0_0] : memref<16x128xf32, #tpu.memory_space<vmem>>, vector<16x128xf32>
    %c0_1 = arith.constant 0 : index
    %c0_2 = arith.constant 0 : index
    %c0_3 = arith.constant 0 : index
    %1 = vector.load %arg2[%c0_1, %c0_2, %c0_3] : memref<2x128x128xbf16, #tpu.memory_space<vmem>>, vector<1x128x128xbf16>
    %2 = vector.shape_cast %1 : vector<1x128x128xbf16> to vector<128x128xbf16>
    %c0_4 = arith.constant 0 : index
    %c0_5 = arith.constant 0 : index
    %c0_6 = arith.constant 0 : index
    %3 = vector.load %arg3[%c0_4, %c0_5, %c0_6] : memref<2x1x128xf32, #tpu.memory_space<vmem>>, vector<1x1x128xf32>
    %4 = vector.shape_cast %3 : vector<1x1x128xf32> to vector<1x128xf32>
    %5 = arith.truncf %0 : vector<16x128xf32> to vector<16x128xbf16>
    %cst = arith.constant dense<0.000000e+00> : vector<16x128xf32>
    %6 = tpu.matmul %5, %2, %cst {dimension_numbers = #tpu.dot_dimension_numbers<[1], [0], [0], [1], [0, 0, 1, 1], [], []>} : vector<16x128xbf16>, vector<128x128xbf16>, vector<16x128xf32> -> vector<16x128xf32>
    %7 = vector.broadcast %4 : vector<1x128xf32> to vector<16x128xf32>
    %8 = arith.addf %6, %7 : vector<16x128xf32>
    %9 = math.tanh %8 : vector<16x128xf32>
    %10 = arith.addf %0, %9 : vector<16x128xf32>
    %c1 = arith.constant 1 : index
    %c0_7 = arith.constant 0 : index
    %c0_8 = arith.constant 0 : index
    %11 = vector.load %arg2[%c1, %c0_7, %c0_8] : memref<2x128x128xbf16, #tpu.memory_space<vmem>>, vector<1x128x128xbf16>
    %12 = vector.shape_cast %11 : vector<1x128x128xbf16> to vector<128x128xbf16>
    %c1_9 = arith.constant 1 : index
    %c0_10 = arith.constant 0 : index
    %c0_11 = arith.constant 0 : index
    %13 = vector.load %arg3[%c1_9, %c0_10, %c0_11] : memref<2x1x128xf32, #tpu.memory_space<vmem>>, vector<1x1x128xf32>
    %14 = vector.shape_cast %13 : vector<1x1x128xf32> to vector<1x128xf32>
    %15 = arith.truncf %10 : vector<16x128xf32> to vector<16x128xbf16>
    %cst_12 = arith.constant dense<0.000000e+00> : vector<16x128xf32>
    %16 = tpu.matmul %15, %12, %cst_12 {dimension_numbers = #tpu.dot_dimension_numbers<[1], [0], [0], [1], [0, 0, 1, 1], [], []>} : vector<16x128xbf16>, vector<128x128xbf16>, vector<16x128xf32> -> vector<16x128xf32>
    %17 = vector.broadcast %14 : vector<1x128xf32> to vector<16x128xf32>
    %18 = arith.addf %16, %17 : vector<16x128xf32>
    %19 = math.tanh %18 : vector<16x128xf32>
    %20 = arith.addf %10, %19 : vector<16x128xf32>
    %cst_13 = arith.constant dense<0.000000e+00> : vector<16xf32>
    %21 = vector.multi_reduction <add>, %20, %cst_13 [1] : vector<16x128xf32> to vector<16xf32>
    %22 = vector.shape_cast %21 : vector<16xf32> to vector<16x1xf32>
    %cst_14 = arith.constant 1.280000e+02 : f32
    %23 = vector.broadcast %cst_14 : f32 to vector<16x1xf32>
    %24 = arith.divf %22, %23 : vector<16x1xf32>
    %25 = vector.broadcast %24 : vector<16x1xf32> to vector<16x128xf32>
    %26 = arith.subf %20, %25 : vector<16x128xf32>
    %27 = arith.mulf %26, %26 : vector<16x128xf32>
    %cst_15 = arith.constant dense<0.000000e+00> : vector<16xf32>
    %28 = vector.multi_reduction <add>, %27, %cst_15 [1] : vector<16x128xf32> to vector<16xf32>
    %29 = vector.shape_cast %28 : vector<16xf32> to vector<16x1xf32>
    %cst_16 = arith.constant 1.270000e+02 : f32
    %30 = vector.broadcast %cst_16 : f32 to vector<16x1xf32>
    %31 = arith.divf %29, %30 : vector<16x1xf32>
    %32 = math.sqrt %31 : vector<16x1xf32>
    %cst_17 = arith.constant 9.99999997E-7 : f32
    %33 = vector.broadcast %cst_17 : f32 to vector<16x1xf32>
    %34 = arith.addf %32, %33 : vector<16x1xf32>
    %cst_18 = arith.constant 1.000000e+00 : f32
    %35 = vector.broadcast %cst_18 : f32 to vector<16x1xf32>
    %36 = arith.divf %35, %34 : vector<16x1xf32>
    %c0_19 = arith.constant 0 : index
    %c0_20 = arith.constant 0 : index
    %37 = vector.load %arg4[%c0_19, %c0_20] : memref<1x128xf32, #tpu.memory_space<vmem>>, vector<1x128xf32>
    %38 = vector.broadcast %37 : vector<1x128xf32> to vector<16x128xf32>
    %39 = arith.mulf %38, %26 : vector<16x128xf32>
    %40 = vector.broadcast %36 : vector<16x1xf32> to vector<16x128xf32>
    %41 = arith.mulf %39, %40 : vector<16x128xf32>
    %c0_21 = arith.constant 0 : index
    %c0_22 = arith.constant 0 : index
    %42 = vector.load %arg5[%c0_21, %c0_22] : memref<1x128xf32, #tpu.memory_space<vmem>>, vector<1x128xf32>
    %43 = vector.broadcast %42 : vector<1x128xf32> to vector<16x128xf32>
    %44 = arith.addf %41, %43 : vector<16x128xf32>
    %c0_23 = arith.constant 0 : index
    %c0_24 = arith.constant 0 : index
    %45 = vector.load %arg6[%c0_23, %c0_24] : memref<16x128xf32, #tpu.memory_space<vmem>>, vector<16x128xf32>
    tpu.vector_store %arg6[%c0_23, %c0_24], %44 {strides = array<i32>} : memref<16x128xf32, #tpu.memory_space<vmem>>, vector<16x128xf32>,
    return
  }
  func.func @transform_0(%arg0: i32) -> (i32, i32) {
    %c0_i32 = arith.constant 0 : i32
    %c0_i32_0 = arith.constant 0 : i32
    return %arg0, %c0_i32 : i32, i32
  }
  func.func @transform_1(%arg0: i32) -> (i32, i32, i32) {
    %c0_i32 = arith.constant 0 : i32
    %c0_i32_0 = arith.constant 0 : i32
    %c0_i32_1 = arith.constant 0 : i32
    %c0_i32_2 = arith.constant 0 : i32
    return %c0_i32, %c0_i32_0, %c0_i32_1 : i32, i32, i32
  }
  func.func @transform_2(%arg0: i32) -> (i32, i32, i32) {
    %c0_i32 = arith.constant 0 : i32
    %c0_i32_0 = arith.constant 0 : i32
    %c0_i32_1 = arith.constant 0 : i32
    %c0_i32_2 = arith.constant 0 : i32
    return %c0_i32, %c0_i32_0, %c0_i32_1 : i32, i32, i32
  }
  func.func @transform_3(%arg0: i32) -> (i32, i32) {
    %c0_i32 = arith.constant 0 : i32
    %c0_i32_0 = arith.constant 0 : i32
    %c0_i32_1 = arith.constant 0 : i32
    return %c0_i32, %c0_i32_0 : i32, i32
  }
  func.func @transform_4(%arg0: i32) -> (i32, i32) {
    %c0_i32 = arith.constant 0 : i32
    %c0_i32_0 = arith.constant 0 : i32
    %c0_i32_1 = arith.constant 0 : i32
    return %c0_i32, %c0_i32_0 : i32, i32
  }
  func.func @transform_5(%arg0: i32) -> (i32, i32) {
    %c0_i32 = arith.constant 0 : i32
    %c0_i32_0 = arith.constant 0 : i32
    return %arg0, %c0_i32 : i32, i32
  }
}

module attributes {stable_mosaic.version = 11 : i64} {
  func.func @_fused_decoder_kernel(%arg0: i32, %arg1: memref<16x128xf32, #tpu.memory_space<vmem>>, %arg2: memref<2x128x128xbf16, #tpu.memory_space<vmem>>, %arg3: memref<2x1x128xf32, #tpu.memory_space<vmem>>, %arg4: memref<1x128xf32, #tpu.memory_space<vmem>>, %arg5: memref<1x128xf32, #tpu.memory_space<vmem>>, %arg6: memref<16x128xf32, #tpu.memory_space<vmem>>) attributes {dimension_semantics = [#tpu.dimension_semantics<parallel>], iteration_bounds = array<i64: 1>, scalar_prefetch = 0 : i64, scratch_operands = 0 : i64, tpu.core_type = #tpu.core_type<tc>, window_params = [{transform_indices = @transform_0, window_bounds = array<i64: 16, 128>}, {pipeline_mode = #tpu.pipeline_mode<synchronous>, transform_indices = @transform_1, window_bounds = array<i64: 2, 128, 128>}, {pipeline_mode = #tpu.pipeline_mode<synchronous>, transform_indices = @transform_2, window_bounds = array<i64: 2, 1, 128>}, {pipeline_mode = #tpu.pipeline_mode<synchronous>, transform_indices = @transform_3, window_bounds = array<i64: 1, 128>}, {pipeline_mode = #tpu.pipeline_mode<synchronous>, transform_indices = @transform_4, window_bounds = array<i64: 1, 128>}, {transform_indices = @transform_5, window_bounds = array<i64: 16, 128>}]} {
    %c0 = arith.constant 0 : index
    %c0_0 = arith.constant 0 : index
    %0 = vector.load %arg1[%c0, %c0_0] : memref<16x128xf32, #tpu.memory_space<vmem>>, vector<16x128xf32>
    %c0_1 = arith.constant 0 : index
    %c0_2 = arith.constant 0 : index
    %c0_3 = arith.constant 0 : index
    %1 = vector.load %arg2[%c0_1, %c0_2, %c0_3] : memref<2x128x128xbf16, #tpu.memory_space<vmem>>, vector<1x128x128xbf16>
    %2 = vector.shape_cast %1 : vector<1x128x128xbf16> to vector<128x128xbf16>
    %c0_4 = arith.constant 0 : index
    %c0_5 = arith.constant 0 : index
    %c0_6 = arith.constant 0 : index
    %3 = vector.load %arg3[%c0_4, %c0_5, %c0_6] : memref<2x1x128xf32, #tpu.memory_space<vmem>>, vector<1x1x128xf32>
    %4 = vector.shape_cast %3 : vector<1x1x128xf32> to vector<1x128xf32>
    %5 = arith.truncf %0 : vector<16x128xf32> to vector<16x128xbf16>
    %cst = arith.constant dense<0.000000e+00> : vector<16x128xf32>
    %6 = tpu.matmul %5, %2, %cst {dimension_numbers = #tpu.dot_dimension_numbers<[1], [0], [0], [1], [0, 0, 1, 1], [], []>} : vector<16x128xbf16>, vector<128x128xbf16>, vector<16x128xf32> -> vector<16x128xf32>
    %7 = vector.broadcast %4 : vector<1x128xf32> to vector<16x128xf32>
    %8 = arith.addf %6, %7 : vector<16x128xf32>
    %9 = math.tanh %8 : vector<16x128xf32>
    %10 = arith.addf %0, %9 : vector<16x128xf32>
    %c1 = arith.constant 1 : index
    %c0_7 = arith.constant 0 : index
    %c0_8 = arith.constant 0 : index
    %11 = vector.load %arg2[%c1, %c0_7, %c0_8] : memref<2x128x128xbf16, #tpu.memory_space<vmem>>, vector<1x128x128xbf16>
    %12 = vector.shape_cast %11 : vector<1x128x128xbf16> to vector<128x128xbf16>
    %c1_9 = arith.constant 1 : index
    %c0_10 = arith.constant 0 : index
    %c0_11 = arith.constant 0 : index
    %13 = vector.load %arg3[%c1_9, %c0_10, %c0_11] : memref<2x1x128xf32, #tpu.memory_space<vmem>>, vector<1x1x128xf32>
    %14 = vector.shape_cast %13 : vector<1x1x128xf32> to vector<1x128xf32>
    %15 = arith.truncf %10 : vector<16x128xf32> to vector<16x128xbf16>
    %cst_12 = arith.constant dense<0.000000e+00> : vector<16x128xf32>
    %16 = tpu.matmul %15, %12, %cst_12 {dimension_numbers = #tpu.dot_dimension_numbers<[1], [0], [0], [1], [0, 0, 1, 1], [], []>} : vector<16x128xbf16>, vector<128x128xbf16>, vector<16x128xf32> -> vector<16x128xf32>
    %17 = vector.broadcast %14 : vector<1x128xf32> to vector<16x128xf32>
    %18 = arith.addf %16, %17 : vector<16x128xf32>
    %19 = math.tanh %18 : vector<16x128xf32>
    %20 = arith.addf %10, %19 : vector<16x128xf32>
    %cst_13 = arith.constant dense<0.000000e+00> : vector<16xf32>
    %21 = vector.multi_reduction <add>, %20, %cst_13 [1] : vector<16x128xf32> to vector<16xf32>
    %22 = vector.shape_cast %21 : vector<16xf32> to vector<16x1xf32>
    %cst_14 = arith.constant 1.280000e+02 : f32
    %23 = vector.broadcast %cst_14 : f32 to vector<16x1xf32>
    %24 = arith.divf %22, %23 : vector<16x1xf32>
    %25 = vector.broadcast %24 : vector<16x1xf32> to vector<16x128xf32>
    %26 = arith.subf %20, %25 : vector<16x128xf32>
    %27 = arith.mulf %26, %26 : vector<16x128xf32>
    %cst_15 = arith.constant dense<0.000000e+00> : vector<16xf32>
    %28 = vector.multi_reduction <add>, %27, %cst_15 [1] : vector<16x128xf32> to vector<16xf32>
    %29 = vector.shape_cast %28 : vector<16xf32> to vector<16x1xf32>
    %cst_16 = arith.constant 1.270000e+02 : f32
    %30 = vector.broadcast %cst_16 : f32 to vector<16x1xf32>
    %31 = arith.divf %29, %30 : vector<16x1xf32>
    %32 = math.sqrt %31 : vector<16x1xf32>
    %cst_17 = arith.constant 9.99999997E-7 : f32
    %33 = vector.broadcast %cst_17 : f32 to vector<16x1xf32>
    %34 = arith.addf %32, %33 : vector<16x1xf32>
    %cst_18 = arith.constant 1.000000e+00 : f32
    %35 = vector.broadcast %cst_18 : f32 to vector<16x1xf32>
    %36 = arith.divf %35, %34 : vector<16x1xf32>
    %c0_19 = arith.constant 0 : index
    %c0_20 = arith.constant 0 : index
    %37 = vector.load %arg4[%c0_19, %c0_20] : memref<1x128xf32, #tpu.memory_space<vmem>>, vector<1x128xf32>
    %38 = vector.broadcast %37 : vector<1x128xf32> to vector<16x128xf32>
    %39 = arith.mulf %38, %26 : vector<16x128xf32>
    %40 = vector.broadcast %36 : vector<16x1xf32> to vector<16x128xf32>
    %41 = arith.mulf %39, %40 : vector<16x128xf32>
    %c0_21 = arith.constant 0 : index
    %c0_22 = arith.constant 0 : index
    %42 = vector.load %arg5[%c0_21, %c0_22] : memref<1x128xf32, #tpu.memory_space<vmem>>, vector<1x128xf32>
    %43 = vector.broadcast %42 : vector<1x128xf32> to vector<16x128xf32>
    %44 = arith.addf %41, %43 : vector<16x128xf32>
    %c0_23 = arith.constant 0 : index
    %c0_24 = arith.constant 0 : index
    %45 = vector.load %arg6[%c0_23, %c0_24] : memref<16x128xf32, #tpu.memory_space<vmem>>, vector<16x128xf32>
    tpu.vector_store %arg6[%c0_23, %c0_24], %44 {strides = array<i32>} : memref<16x128xf32, #tpu.memory_space<vmem>>, vector<16x128xf32>,
    return
  }
  func.func @transform_0(%arg0: i32) -> (i32, i32) {
    %c0_i32 = arith.constant 0 : i32
    %c0_i32_0 = arith.constant 0 : i32
    return %arg0, %c0_i32 : i32, i32
  }
  func.func @transform_1(%arg0: i32) -> (i32, i32, i32) {
    %c0_i32 = arith.constant 0 : i32
    %c0_i32_0 = arith.constant 0 : i32
    %c0_i32_1 = arith.constant 0 : i32
    %c0_i32_2 = arith.constant 0 : i32
    return %c0_i32, %c0_i32_0, %c0_i32_1 : i32, i32, i32
  }
  func.func @transform_2(%arg0: i32) -> (i32, i32, i32) {
    %c0_i32 = arith.constant 0 : i32
    %c0_i32_0 = arith.constant 0 : i32
    %c0_i32_1 = arith.constant 0 : i32
    %c0_i32_2 = arith.constant 0 : i32
    return %c0_i32, %c0_i32_0, %c0_i32_1 : i32, i32, i32
  }
  func.func @transform_3(%arg0: i32) -> (i32, i32) {
    %c0_i32 = arith.constant 0 : i32
    %c0_i32_0 = arith.constant 0 : i32
    %c0_i32_1 = arith.constant 0 : i32
    return %c0_i32, %c0_i32_0 : i32, i32
  }
  func.func @transform_4(%arg0: i32) -> (i32, i32) {
    %c0_i32 = arith.constant 0 : i32
    %c0_i32_0 = arith.constant 0 : i32
    %c0_i32_1 = arith.constant 0 : i32
    return %c0_i32, %c0_i32_0 : i32, i32
  }
  func.func @transform_5(%arg0: i32) -> (i32, i32) {
    %c0_i32 = arith.constant 0 : i32
    %c0_i32_0 = arith.constant 0 : i32
    return %arg0, %c0_i32 : i32, i32
  }
}

</mosaic_0001>

<llo_original>
// kernel: tpu_custom_call.1
$region0: #{tpu_custom_call.1}
  #allocation0 [shape = 'u32[]', space=smem, size = 0x4, offset = 0x4, fixed_abs, tag = 'smem constant byte address 0x4 - core index']
  #allocation1 [shape = 'u32[144,128]{1,0:T(1,128)}', space=vmem, size = 0x12000, scoped, tag = 'internal scratch']
  %s0 = inlined_call_operand.hbm [shape: f32[16,128], index: 0, kind: input, shape index: {}]
  %s1 = inlined_call_operand.hbm [shape: bf16[2,128,128], index: 1, kind: input, shape index: {}]
  %s2 = inlined_call_operand.vmem [shape: f32[2,1,128], index: 2, kind: input, shape index: {}]
  %s3 = inlined_call_operand.vmem [shape: f32[1,128], index: 3, kind: input, shape index: {}]
  %s4 = inlined_call_operand.vmem [shape: f32[1,128], index: 4, kind: input, shape index: {}]
  %s5 = inlined_call_operand.hbm [shape: f32[16,128], index: 5, kind: output, shape index: {}]
  %s6 = sld [smem:[#allocation0]]
  $region38: #{tpu_custom_call.1} parent=0
    _
  %s8 = ssub.s32 1, %s6
  %s9 = scalar_select 0, %s8, %s6
  $region1: #{tpu_custom_call.1} parent=0
    #allocation2 [shape = 'u8[8192]{0}', space=vmem, size = 0x2000, scoped, tag = 'input window, operand 0, single buffered']
    #allocation3 [shape = 's32[1]{0}', space=sflag, size = 0x4, scoped, tag = 'scoped memory for tpu_custom_call.1']
    #allocation4 [shape = 's32[1]{0}', space=sflag, size = 0x4, scoped, tag = 'scoped memory for tpu_custom_call.1']
    #allocation5 [shape = 'u8[65536]{0}', space=vmem, size = 0x10000, scoped, tag = 'input window, operand 1, single buffered']
    #allocation6 [shape = 's32[1]{0}', space=sflag, size = 0x4, scoped, tag = 'scoped memory for tpu_custom_call.1']
    #allocation7 [shape = 'u8[8192]{0}', space=vmem, size = 0x2000, scoped, tag = 'output window, operand 0, single buffered']
    %10 = vsyncpa [#allocation3], 0
    %11 = vsyncpa [#allocation6], 0
    %12 = vsyncpa [#allocation4], 0
    // Predicated region
    $region2: #{tpu_custom_call.1} parent=1 // pred_check
      _
    $region3: #{tpu_custom_call.1} parent=1 // pred_check_branch
      %14 = sbr.rel (0) target = $region5
    $region4: #{tpu_custom_call.1} parent=1 // pred_region
      %s16 = ssub.s32 256, 256
      %17 = vsyncadd [#allocation3], %s16
      %s18 = sshll.u32 [#allocation2], 4
      %s19 = int_to_ptr.vmem [resolvable:$true] %s18
      %24 = dma.hbm_to_vmem [thread:$0]  %s0, 256, %s19, [#allocation3], 128, 128, 8
    $region5: #{tpu_custom_call.1} parent=1 // pred_fallthru
      _
    // Predicated region
    $region6: #{tpu_custom_call.1} parent=1 // pred_check
      _
    $region7: #{tpu_custom_call.1} parent=1 // pred_check_branch
      %26 = sbr.rel (0) target = $region9
    $region8: #{tpu_custom_call.1} parent=1 // pred_region
      %s28 = ssub.s32 2048, 2048
      %29 = vsyncadd [#allocation6], %s28
      %s30 = sshll.u32 [#allocation5], 4
      %s31 = int_to_ptr.vmem [resolvable:$true] %s30
      %36 = dma.hbm_to_vmem [thread:$0]  %s1, 2048, %s31, [#allocation6], 64, 64, 4
    $region9: #{tpu_custom_call.1} parent=1 // pred_fallthru
      _
    // Predicated region
    $region10: #{tpu_custom_call.1} parent=1 // pred_check
      _
    $region11: #{tpu_custom_call.1} parent=1 // pred_check_branch
      %38 = sbr.rel (0) target = $region13
    $region12: #{tpu_custom_call.1} parent=1 // pred_region
      _
    $region13: #{tpu_custom_call.1} parent=1 // pred_fallthru
      _
    // Predicated region
    $region14: #{tpu_custom_call.1} parent=1 // pred_check
      _
    $region15: #{tpu_custom_call.1} parent=1 // pred_check_branch
      %40 = sbr.rel (0) target = $region17
    $region16: #{tpu_custom_call.1} parent=1 // pred_region
      _
    $region17: #{tpu_custom_call.1} parent=1 // pred_fallthru
      _
    // Predicated region
    $region18: #{tpu_custom_call.1} parent=1 // pred_check
      _
    $region19: #{tpu_custom_call.1} parent=1 // pred_check_branch
      %42 = sbr.rel (0) target = $region21
    $region20: #{tpu_custom_call.1} parent=1 // pred_region
      _
    $region21: #{tpu_custom_call.1} parent=1 // pred_fallthru
      _
    // Predicated region
    $region22: #{tpu_custom_call.1} parent=1 // pred_check
      _
    $region23: #{tpu_custom_call.1} parent=1 // pred_check_branch
      %44 = sbr.rel (0) target = $region25
    $region24: #{tpu_custom_call.1} parent=1 // pred_region
      %45 = dma.done [#allocation3], 256
    $region25: #{tpu_custom_call.1} parent=1 // pred_fallthru
      _
    // Predicated region
    $region26: #{tpu_custom_call.1} parent=1 // pred_check
      _
    $region27: #{tpu_custom_call.1} parent=1 // pred_check_branch
      %47 = sbr.rel (0) target = $region29
    $region28: #{tpu_custom_call.1} parent=1 // pred_region
      %48 = dma.done [#allocation6], 2048
    $region29: #{tpu_custom_call.1} parent=1 // pred_fallthru
      _
    %v50 = vld [vmem:[#allocation2] sm:$0xff]
    %v51 = vld [vmem:[#allocation2 + $0x8] sm:$0xff]
    %v52 = vld [vmem:[#allocation5] sm:$0xf]
    %v53 = vld [vmem:[#allocation5 + $0x4] sm:$0xf]
    %v54 = vld [vmem:[#allocation5 + $0x8] sm:$0xf]
    %v55 = vld [vmem:[#allocation5 + $0xc] sm:$0xf]
    %v56 = vld [vmem:[#allocation5 + $0x10] sm:$0xf]
    %v57 = vld [vmem:[#allocation5 + $0x14] sm:$0xf]
    %v58 = vld [vmem:[#allocation5 + $0x18] sm:$0xf]
    %v59 = vld [vmem:[#allocation5 + $0x1c] sm:$0xf]
    %v60 = vld [vmem:[#allocation5 + $0x20] sm:$0xf]
    %v61 = vld [vmem:[#allocation5 + $0x24] sm:$0xf]
    %v62 = vld [vmem:[#allocation5 + $0x28] sm:$0xf]
    %v63 = vld [vmem:[#allocation5 + $0x2c] sm:$0xf]
    %v64 = vld [vmem:[#allocation5 + $0x30] sm:$0xf]
    %v65 = vld [vmem:[#allocation5 + $0x34] sm:$0xf]
    %v66 = vld [vmem:[#allocation5 + $0x38] sm:$0xf]
    %v67 = vld [vmem:[#allocation5 + $0x3c] sm:$0xf]
    %v68 = vld [vmem:[%s2] sm:$0x1]
    %v69 = vpack.c.bf16 %v51, %v50
    %v71 = vlaneseq
    %v72 = vshrl.u32 %v71, 7
    %v73 = vsub.s32 0, %v72
    %v74 = vrot.slane %v68, %v73
    %v92 = vunpack.c.l.b16 %v52
    %v93 = vunpack.c.l.b16 %v53
    %v94 = vunpack.c.l.b16 %v54
    %v95 = vunpack.c.l.b16 %v55
    %v96 = vunpack.c.l.b16 %v56
    %v97 = vunpack.c.l.b16 %v57
    %v98 = vunpack.c.l.b16 %v58
    %v99 = vunpack.c.l.b16 %v59
    %v100 = vunpack.c.l.b16 %v60
    %v101 = vunpack.c.l.b16 %v61
    %v102 = vunpack.c.l.b16 %v62
    %v103 = vunpack.c.l.b16 %v63
    %v104 = vunpack.c.l.b16 %v64
    %v105 = vunpack.c.l.b16 %v65
    %v106 = vunpack.c.l.b16 %v66
    %v107 = vunpack.c.l.b16 %v67
    %v108 = vpack.c.b16 %v93, %v92
    %v109 = vpack.c.b16 %v95, %v94
    %v110 = vpack.c.b16 %v97, %v96
    %v111 = vpack.c.b16 %v99, %v98
    %v112 = vpack.c.b16 %v101, %v100
    %v113 = vpack.c.b16 %v103, %v102
    %v114 = vpack.c.b16 %v105, %v104
    %v115 = vpack.c.b16 %v107, %v106
    %124 = vmatprep.subr.bf16.mxu0 0
    %125 = vmatpush1.bf16.msra.mxu0 %v115
    %126 = vmatprep.subr.bf16.mxu0 0
    %127 = vmatpush1.bf16.msra.mxu0 %v114
    %128 = vmatprep.subr.bf16.mxu0 0
    %129 = vmatpush1.bf16.msra.mxu0 %v113
    %130 = vmatprep.subr.bf16.mxu0 0
    %131 = vmatpush1.bf16.msra.mxu0 %v112
    %132 = vmatprep.subr.bf16.mxu0 0
    %133 = vmatpush1.bf16.msra.mxu0 %v111
    %134 = vmatprep.subr.bf16.mxu0 0
    %135 = vmatpush1.bf16.msra.mxu0 %v110
    %136 = vmatprep.subr.bf16.mxu0 0
    %137 = vmatpush1.bf16.msra.mxu0 %v109
    %138 = vmatprep.subr.bf16.mxu0 0
    %139 = vmatpush1.bf16.msra.mxu0 %v108
    %140 = vmatprep.subr.bf16.mxu0 0
    %141 = vmatpush2.bf16.msra.mxu0 0
    %142 = vmatprep.subr.bf16.mxu0 0
    %143 = vmatpush2.bf16.msra.mxu0 0
    %144 = vmatprep.subr.bf16.mxu0 0
    %145 = vmatpush2.bf16.msra.mxu0 0
    %146 = vmatprep.subr.bf16.mxu0 0
    %147 = vmatpush2.bf16.msra.mxu0 0
    %148 = vmatprep.subr.bf16.mxu0 0
    %149 = vmatpush2.bf16.msra.mxu0 0
    %150 = vmatprep.subr.bf16.mxu0 0
    %151 = vmatpush2.bf16.msra.mxu0 0
    %152 = vmatprep.subr.bf16.mxu0 0
    %153 = vmatpush2.bf16.msra.mxu0 0
    %154 = vmatprep.subr.bf16.mxu0 0
    %155 = vmatpush2.bf16.msra.mxu0 0
    %156 = vmatprep.mubr.bf16.mxu0 0
    %157 = vmatmul.mubr.bf16.gmra.mxu0 %v69
    %v158 = vpop.f32.mrf.mxu0
    %v159 = vadd.f32 %v74, %v158
    %v160 = vpop.f32.mrf.mxu0
    %v161 = vpop.f32.mrf.mxu0
    %v162 = vadd.f32 %v74, %v161
    %v163 = vpop.f32.mrf.mxu0
    %164 = vdwg.mxu0
    %v165 = vtanh.pop %v159
    %v166 = vtanh.pop %v162
    %v167 = vadd.f32 %v50, %v165
    %v168 = vadd.f32 %v51, %v166
    %s169 = scalar_lea.vmem [#allocation5], 64
    %v170 = vld [vmem:[%s169] sm:$0xf]
    %v171 = vld [vmem:[%s169 + $0x4] sm:$0xf]
    %v172 = vld [vmem:[%s169 + $0x8] sm:$0xf]
    %v173 = vld [vmem:[%s169 + $0xc] sm:$0xf]
    %v174 = vld [vmem:[%s169 + $0x10] sm:$0xf]
    %v175 = vld [vmem:[%s169 + $0x14] sm:$0xf]
    %v176 = vld [vmem:[%s169 + $0x18] sm:$0xf]
    %v177 = vld [vmem:[%s169 + $0x1c] sm:$0xf]
    %v178 = vld [vmem:[%s169 + $0x20] sm:$0xf]
    %v179 = vld [vmem:[%s169 + $0x24] sm:$0xf]
    %v180 = vld [vmem:[%s169 + $0x28] sm:$0xf]
    %v181 = vld [vmem:[%s169 + $0x2c] sm:$0xf]
    %v182 = vld [vmem:[%s169 + $0x30] sm:$0xf]
    %v183 = vld [vmem:[%s169 + $0x34] sm:$0xf]
    %v184 = vld [vmem:[%s169 + $0x38] sm:$0xf]
    %v185 = vld [vmem:[%s169 + $0x3c] sm:$0xf]
    %s186 = scalar_lea.vmem %s2, 1
    %v187 = vld [vmem:[%s186] sm:$0x1]
    %v188 = vpack.c.bf16 %v168, %v167
    %v190 = vlaneseq
    %v191 = vshrl.u32 %v190, 7
    %v192 = vsub.s32 0, %v191
    %v193 = vrot.slane %v187, %v192
    %v211 = vunpack.c.l.b16 %v170
    %v212 = vunpack.c.l.b16 %v171
    %v213 = vunpack.c.l.b16 %v172
    %v214 = vunpack.c.l.b16 %v173
    %v215 = vunpack.c.l.b16 %v174
    %v216 = vunpack.c.l.b16 %v175
    %v217 = vunpack.c.l.b16 %v176
    %v218 = vunpack.c.l.b16 %v177
    %v219 = vunpack.c.l.b16 %v178
    %v220 = vunpack.c.l.b16 %v179
    %v221 = vunpack.c.l.b16 %v180
    %v222 = vunpack.c.l.b16 %v181
    %v223 = vunpack.c.l.b16 %v182
    %v224 = vunpack.c.l.b16 %v183
    %v225 = vunpack.c.l.b16 %v184
    %v226 = vunpack.c.l.b16 %v185
    %v227 = vpack.c.b16 %v212, %v211
    %v228 = vpack.c.b16 %v214, %v213
    %v229 = vpack.c.b16 %v216, %v215
    %v230 = vpack.c.b16 %v218, %v217
    %v231 = vpack.c.b16 %v220, %v219
    %v232 = vpack.c.b16 %v222, %v221
    %v233 = vpack.c.b16 %v224, %v223
    %v234 = vpack.c.b16 %v226, %v225
    %243 = vmatprep.subr.bf16.mxu0 0
    %244 = vmatpush1.bf16.msra.mxu0 %v234
    %245 = vmatprep.subr.bf16.mxu0 0
    %246 = vmatpush1.bf16.msra.mxu0 %v233
    %247 = vmatprep.subr.bf16.mxu0 0
    %248 = vmatpush1.bf16.msra.mxu0 %v232
    %249 = vmatprep.subr.bf16.mxu0 0
    %250 = vmatpush1.bf16.msra.mxu0 %v231
    %251 = vmatprep.subr.bf16.mxu0 0
    %252 = vmatpush1.bf16.msra.mxu0 %v230
    %253 = vmatprep.subr.bf16.mxu0 0
    %254 = vmatpush1.bf16.msra.mxu0 %v229
    %255 = vmatprep.subr.bf16.mxu0 0
    %256 = vmatpush1.bf16.msra.mxu0 %v228
    %257 = vmatprep.subr.bf16.mxu0 0
    %258 = vmatpush1.bf16.msra.mxu0 %v227
    %259 = vmatprep.subr.bf16.mxu0 0
    %260 = vmatpush2.bf16.msra.mxu0 0
    %261 = vmatprep.subr.bf16.mxu0 0
    %262 = vmatpush2.bf16.msra.mxu0 0
    %263 = vmatprep.subr.bf16.mxu0 0
    %264 = vmatpush2.bf16.msra.mxu0 0
    %265 = vmatprep.subr.bf16.mxu0 0
    %266 = vmatpush2.bf16.msra.mxu0 0
    %267 = vmatprep.subr.bf16.mxu0 0
    %268 = vmatpush2.bf16.msra.mxu0 0
    %269 = vmatprep.subr.bf16.mxu0 0
    %270 = vmatpush2.bf16.msra.mxu0 0
    %271 = vmatprep.subr.bf16.mxu0 0
    %272 = vmatpush2.bf16.msra.mxu0 0
    %273 = vmatprep.subr.bf16.mxu0 0
    %274 = vmatpush2.bf16.msra.mxu0 0
    %275 = vmatprep.mubr.bf16.mxu0 0
    %276 = vmatmul.mubr.bf16.gmra.mxu0 %v188
    %v277 = vpop.f32.mrf.mxu0
    %v278 = vadd.f32 %v193, %v277
    %v279 = vpop.f32.mrf.mxu0
    %v280 = vpop.f32.mrf.mxu0
    %v281 = vadd.f32 %v193, %v280
    %v282 = vpop.f32.mrf.mxu0
    %283 = vdwg.mxu0
    %v284 = vtanh.pop %v278
    %v285 = vtanh.pop %v281
    %v286 = vadd.f32 %v167, %v284
    %v287 = vadd.f32 %v168, %v285
    %288 = vadd.xlane.f32.xlu0 %v286
    %v289 = vpop.xlane.xlu0 %288
    %290 = vadd.xlane.f32.xlu0 %v287
    %v291 = vpop.xlane.xlu0 %290
    %v292 = vrcp.pop 128.0
    %v293 = vmul.f32 %v289, %v292
    %v294 = vmul.f32 %v291, %v292
    %v295 = vsub.f32 %v286, %v293
    %v296 = vsub.f32 %v287, %v294
    %v297 = vmul.f32 %v295, %v295
    %v298 = vmul.f32 %v296, %v296
    %299 = vadd.xlane.f32.xlu0 %v297
    %v300 = vpop.xlane.xlu0 %299
    %301 = vadd.xlane.f32.xlu0 %v298
    %v302 = vpop.xlane.xlu0 %301
    %v303 = vrcp.pop 127.0
    %v304 = vmul.f32 %v300, %v303
    %v305 = vmul.f32 %v302, %v303
    %v306 = vrsqrt.pop %v304
    %v307 = vmul.f32 %v304, %v306
    %vm308 = vcmp.eq.f32.partialorder %v304, inf
    %v309 = vsel %vm308, %v304, %v307
    %vm310 = vcmp.eq.f32.partialorder %v304, 0.0
    %v311 = vand.u32 %v304, 2147483648
    %v312 = vsel %vm310, %v311, %v309
    %v313 = vrsqrt.pop %v305
    %v314 = vmul.f32 %v305, %v313
    %vm315 = vcmp.eq.f32.partialorder %v305, inf
    %v316 = vsel %vm315, %v305, %v314
    %vm317 = vcmp.eq.f32.partialorder %v305, 0.0
    %v318 = vand.u32 %v305, 2147483648
    %v319 = vsel %vm317, %v318, %v316
    %v320 = vadd.f32 %v312, 1e-06
    %v321 = vadd.f32 %v319, 1e-06
    %v322 = vrcp.pop %v320
    %v323 = vmul.f32 1.0, %v322
    %v324 = vrcp.pop %v321
    %v325 = vmul.f32 1.0, %v324
    %v326 = vld [vmem:[%s3] sm:$0x1]
    %v328 = vlaneseq
    %v329 = vshrl.u32 %v328, 7
    %v330 = vsub.s32 0, %v329
    %v331 = vrot.slane %v326, %v330
    %v333 = vmul.f32 %v331, %v295
    %v334 = vmul.f32 %v331, %v296
    %v335 = vmul.f32 %v333, %v323
    %v336 = vmul.f32 %v334, %v325
    %v337 = vld [vmem:[%s4] sm:$0x1]
    %v339 = vlaneseq
    %v340 = vshrl.u32 %v339, 7
    %v341 = vsub.s32 0, %v340
    %v342 = vrot.slane %v337, %v341
    %v344 = vadd.f32 %v335, %v342
    %v345 = vadd.f32 %v336, %v342
    %346 = vst [vmem:[#allocation7] sm:$0xff] %v344
    %347 = vst [vmem:[#allocation7 + $0x8] sm:$0xff] %v345
    // Predicated region
    $region30: #{tpu_custom_call.1} parent=1 // pred_check
      _
    $region31: #{tpu_custom_call.1} parent=1 // pred_check_branch
      %349 = sbr.rel (0) target = $region33
    $region32: #{tpu_custom_call.1} parent=1 // pred_region
      %s351 = ssub.s32 256, 256
      %352 = vsyncadd [#allocation4], %s351
      %s353 = sshll.u32 [#allocation7], 4
      %s354 = int_to_ptr.vmem [resolvable:$true] %s353
      %359 = dma.vmem_to_hbm [thread:$0]  %s354, 256, %s5, [#allocation4], 128, 128, 8
    $region33: #{tpu_custom_call.1} parent=1 // pred_fallthru
      _
    // Predicated region
    $region34: #{tpu_custom_call.1} parent=1 // pred_check
      _
    $region35: #{tpu_custom_call.1} parent=1 // pred_check_branch
      %361 = sbr.rel (0) target = $region37
    $region36: #{tpu_custom_call.1} parent=1 // pred_region
      %362 = dma.done [#allocation4], 256
    $region37: #{tpu_custom_call.1} parent=1 // pred_fallthru
      _
    %363 = vsyncpa [#allocation3], 1
    %364 = vsyncpa [#allocation6], 1
    %365 = vsyncpa [#allocation4], 1

// kernel: tpu_custom_call.1
$region0: #{tpu_custom_call.1}
  #allocation0 [shape = 'u32[]', space=smem, size = 0x4, offset = 0x4, fixed_abs, tag = 'smem constant byte address 0x4 - core index']
  #allocation1 [shape = 'u32[144,128]{1,0:T(1,128)}', space=vmem, size = 0x12000, scoped, tag = 'internal scratch']
  %s0 = inlined_call_operand.hbm [shape: f32[16,128], index: 0, kind: input, shape index: {}]
  %s1 = inlined_call_operand.hbm [shape: bf16[2,128,128], index: 1, kind: input, shape index: {}]
  %s2 = inlined_call_operand.vmem [shape: f32[2,1,128], index: 2, kind: input, shape index: {}]
  %s3 = inlined_call_operand.vmem [shape: f32[1,128], index: 3, kind: input, shape index: {}]
  %s4 = inlined_call_operand.vmem [shape: f32[1,128], index: 4, kind: input, shape index: {}]
  %s5 = inlined_call_operand.hbm [shape: f32[16,128], index: 5, kind: output, shape index: {}]
  %s6 = sld [smem:[#allocation0]]
  $region38: #{tpu_custom_call.1} parent=0
    _
  %s8 = ssub.s32 1, %s6
  %s9 = scalar_select 0, %s8, %s6
  $region1: #{tpu_custom_call.1} parent=0
    #allocation2 [shape = 'u8[8192]{0}', space=vmem, size = 0x2000, scoped, tag = 'input window, operand 0, single buffered']
    #allocation3 [shape = 's32[1]{0}', space=sflag, size = 0x4, scoped, tag = 'scoped memory for tpu_custom_call.1']
    #allocation4 [shape = 's32[1]{0}', space=sflag, size = 0x4, scoped, tag = 'scoped memory for tpu_custom_call.1']
    #allocation5 [shape = 'u8[65536]{0}', space=vmem, size = 0x10000, scoped, tag = 'input window, operand 1, single buffered']
    #allocation6 [shape = 's32[1]{0}', space=sflag, size = 0x4, scoped, tag = 'scoped memory for tpu_custom_call.1']
    #allocation7 [shape = 'u8[8192]{0}', space=vmem, size = 0x2000, scoped, tag = 'output window, operand 0, single buffered']
    %10 = vsyncpa [#allocation3], 0
    %11 = vsyncpa [#allocation6], 0
    %12 = vsyncpa [#allocation4], 0
    // Predicated region
    $region2: #{tpu_custom_call.1} parent=1 // pred_check
      _
    $region3: #{tpu_custom_call.1} parent=1 // pred_check_branch
      %14 = sbr.rel (0) target = $region5
    $region4: #{tpu_custom_call.1} parent=1 // pred_region
      %s16 = ssub.s32 256, 256
      %17 = vsyncadd [#allocation3], %s16
      %s18 = sshll.u32 [#allocation2], 4
      %s19 = int_to_ptr.vmem [resolvable:$true] %s18
      %24 = dma.hbm_to_vmem [thread:$0]  %s0, 256, %s19, [#allocation3], 128, 128, 8
    $region5: #{tpu_custom_call.1} parent=1 // pred_fallthru
      _
    // Predicated region
    $region6: #{tpu_custom_call.1} parent=1 // pred_check
      _
    $region7: #{tpu_custom_call.1} parent=1 // pred_check_branch
      %26 = sbr.rel (0) target = $region9
    $region8: #{tpu_custom_call.1} parent=1 // pred_region
      %s28 = ssub.s32 2048, 2048
      %29 = vsyncadd [#allocation6], %s28
      %s30 = sshll.u32 [#allocation5], 4
      %s31 = int_to_ptr.vmem [resolvable:$true] %s30
      %36 = dma.hbm_to_vmem [thread:$0]  %s1, 2048, %s31, [#allocation6], 64, 64, 4
    $region9: #{tpu_custom_call.1} parent=1 // pred_fallthru
      _
    // Predicated region
    $region10: #{tpu_custom_call.1} parent=1 // pred_check
      _
    $region11: #{tpu_custom_call.1} parent=1 // pred_check_branch
      %38 = sbr.rel (0) target = $region13
    $region12: #{tpu_custom_call.1} parent=1 // pred_region
      _
    $region13: #{tpu_custom_call.1} parent=1 // pred_fallthru
      _
    // Predicated region
    $region14: #{tpu_custom_call.1} parent=1 // pred_check
      _
    $region15: #{tpu_custom_call.1} parent=1 // pred_check_branch
      %40 = sbr.rel (0) target = $region17
    $region16: #{tpu_custom_call.1} parent=1 // pred_region
      _
    $region17: #{tpu_custom_call.1} parent=1 // pred_fallthru
      _
    // Predicated region
    $region18: #{tpu_custom_call.1} parent=1 // pred_check
      _
    $region19: #{tpu_custom_call.1} parent=1 // pred_check_branch
      %42 = sbr.rel (0) target = $region21
    $region20: #{tpu_custom_call.1} parent=1 // pred_region
      _
    $region21: #{tpu_custom_call.1} parent=1 // pred_fallthru
      _
    // Predicated region
    $region22: #{tpu_custom_call.1} parent=1 // pred_check
      _
    $region23: #{tpu_custom_call.1} parent=1 // pred_check_branch
      %44 = sbr.rel (0) target = $region25
    $region24: #{tpu_custom_call.1} parent=1 // pred_region
      %45 = dma.done [#allocation3], 256
    $region25: #{tpu_custom_call.1} parent=1 // pred_fallthru
      _
    // Predicated region
    $region26: #{tpu_custom_call.1} parent=1 // pred_check
      _
    $region27: #{tpu_custom_call.1} parent=1 // pred_check_branch
      %47 = sbr.rel (0) target = $region29
    $region28: #{tpu_custom_call.1} parent=1 // pred_region
      %48 = dma.done [#allocation6], 2048
    $region29: #{tpu_custom_call.1} parent=1 // pred_fallthru
      _
    %v50 = vld [vmem:[#allocation2] sm:$0xff]
    %v51 = vld [vmem:[#allocation2 + $0x8] sm:$0xff]
    %v52 = vld [vmem:[#allocation5] sm:$0xf]
    %v53 = vld [vmem:[#allocation5 + $0x4] sm:$0xf]
    %v54 = vld [vmem:[#allocation5 + $0x8] sm:$0xf]
    %v55 = vld [vmem:[#allocation5 + $0xc] sm:$0xf]
    %v56 = vld [vmem:[#allocation5 + $0x10] sm:$0xf]
    %v57 = vld [vmem:[#allocation5 + $0x14] sm:$0xf]
    %v58 = vld [vmem:[#allocation5 + $0x18] sm:$0xf]
    %v59 = vld [vmem:[#allocation5 + $0x1c] sm:$0xf]
    %v60 = vld [vmem:[#allocation5 + $0x20] sm:$0xf]
    %v61 = vld [vmem:[#allocation5 + $0x24] sm:$0xf]
    %v62 = vld [vmem:[#allocation5 + $0x28] sm:$0xf]
    %v63 = vld [vmem:[#allocation5 + $0x2c] sm:$0xf]
    %v64 = vld [vmem:[#allocation5 + $0x30] sm:$0xf]
    %v65 = vld [vmem:[#allocation5 + $0x34] sm:$0xf]
    %v66 = vld [vmem:[#allocation5 + $0x38] sm:$0xf]
    %v67 = vld [vmem:[#allocation5 + $0x3c] sm:$0xf]
    %v68 = vld [vmem:[%s2] sm:$0x1]
    %v69 = vpack.c.bf16 %v51, %v50
    %v71 = vlaneseq
    %v72 = vshrl.u32 %v71, 7
    %v73 = vsub.s32 0, %v72
    %v74 = vrot.slane %v68, %v73
    %v92 = vunpack.c.l.b16 %v52
    %v93 = vunpack.c.l.b16 %v53
    %v94 = vunpack.c.l.b16 %v54
    %v95 = vunpack.c.l.b16 %v55
    %v96 = vunpack.c.l.b16 %v56
    %v97 = vunpack.c.l.b16 %v57
    %v98 = vunpack.c.l.b16 %v58
    %v99 = vunpack.c.l.b16 %v59
    %v100 = vunpack.c.l.b16 %v60
    %v101 = vunpack.c.l.b16 %v61
    %v102 = vunpack.c.l.b16 %v62
    %v103 = vunpack.c.l.b16 %v63
    %v104 = vunpack.c.l.b16 %v64
    %v105 = vunpack.c.l.b16 %v65
    %v106 = vunpack.c.l.b16 %v66
    %v107 = vunpack.c.l.b16 %v67
    %v108 = vpack.c.b16 %v93, %v92
    %v109 = vpack.c.b16 %v95, %v94
    %v110 = vpack.c.b16 %v97, %v96
    %v111 = vpack.c.b16 %v99, %v98
    %v112 = vpack.c.b16 %v101, %v100
    %v113 = vpack.c.b16 %v103, %v102
    %v114 = vpack.c.b16 %v105, %v104
    %v115 = vpack.c.b16 %v107, %v106
    %124 = vmatprep.subr.bf16.mxu0 0
    %125 = vmatpush1.bf16.msra.mxu0 %v115
    %126 = vmatprep.subr.bf16.mxu0 0
    %127 = vmatpush1.bf16.msra.mxu0 %v114
    %128 = vmatprep.subr.bf16.mxu0 0
    %129 = vmatpush1.bf16.msra.mxu0 %v113
    %130 = vmatprep.subr.bf16.mxu0 0
    %131 = vmatpush1.bf16.msra.mxu0 %v112
    %132 = vmatprep.subr.bf16.mxu0 0
    %133 = vmatpush1.bf16.msra.mxu0 %v111
    %134 = vmatprep.subr.bf16.mxu0 0
    %135 = vmatpush1.bf16.msra.mxu0 %v110
    %136 = vmatprep.subr.bf16.mxu0 0
    %137 = vmatpush1.bf16.msra.mxu0 %v109
    %138 = vmatprep.subr.bf16.mxu0 0
    %139 = vmatpush1.bf16.msra.mxu0 %v108
    %140 = vmatprep.subr.bf16.mxu0 0
    %141 = vmatpush2.bf16.msra.mxu0 0
    %142 = vmatprep.subr.bf16.mxu0 0
    %143 = vmatpush2.bf16.msra.mxu0 0
    %144 = vmatprep.subr.bf16.mxu0 0
    %145 = vmatpush2.bf16.msra.mxu0 0
    %146 = vmatprep.subr.bf16.mxu0 0
    %147 = vmatpush2.bf16.msra.mxu0 0
    %148 = vmatprep.subr.bf16.mxu0 0
    %149 = vmatpush2.bf16.msra.mxu0 0
    %150 = vmatprep.subr.bf16.mxu0 0
    %151 = vmatpush2.bf16.msra.mxu0 0
    %152 = vmatprep.subr.bf16.mxu0 0
    %153 = vmatpush2.bf16.msra.mxu0 0
    %154 = vmatprep.subr.bf16.mxu0 0
    %155 = vmatpush2.bf16.msra.mxu0 0
    %156 = vmatprep.mubr.bf16.mxu0 0
    %157 = vmatmul.mubr.bf16.gmra.mxu0 %v69
    %v158 = vpop.f32.mrf.mxu0
    %v159 = vadd.f32 %v74, %v158
    %v160 = vpop.f32.mrf.mxu0
    %v161 = vpop.f32.mrf.mxu0
    %v162 = vadd.f32 %v74, %v161
    %v163 = vpop.f32.mrf.mxu0
    %164 = vdwg.mxu0
    %v165 = vtanh.pop %v159
    %v166 = vtanh.pop %v162
    %v167 = vadd.f32 %v50, %v165
    %v168 = vadd.f32 %v51, %v166
    %s169 = scalar_lea.vmem [#allocation5], 64
    %v170 = vld [vmem:[%s169] sm:$0xf]
    %v171 = vld [vmem:[%s169 + $0x4] sm:$0xf]
    %v172 = vld [vmem:[%s169 + $0x8] sm:$0xf]
    %v173 = vld [vmem:[%s169 + $0xc] sm:$0xf]
    %v174 = vld [vmem:[%s169 + $0x10] sm:$0xf]
    %v175 = vld [vmem:[%s169 + $0x14] sm:$0xf]
    %v176 = vld [vmem:[%s169 + $0x18] sm:$0xf]
    %v177 = vld [vmem:[%s169 + $0x1c] sm:$0xf]
    %v178 = vld [vmem:[%s169 + $0x20] sm:$0xf]
    %v179 = vld [vmem:[%s169 + $0x24] sm:$0xf]
    %v180 = vld [vmem:[%s169 + $0x28] sm:$0xf]
    %v181 = vld [vmem:[%s169 + $0x2c] sm:$0xf]
    %v182 = vld [vmem:[%s169 + $0x30] sm:$0xf]
    %v183 = vld [vmem:[%s169 + $0x34] sm:$0xf]
    %v184 = vld [vmem:[%s169 + $0x38] sm:$0xf]
    %v185 = vld [vmem:[%s169 + $0x3c] sm:$0xf]
    %s186 = scalar_lea.vmem %s2, 1
    %v187 = vld [vmem:[%s186] sm:$0x1]
    %v188 = vpack.c.bf16 %v168, %v167
    %v190 = vlaneseq
    %v191 = vshrl.u32 %v190, 7
    %v192 = vsub.s32 0, %v191
    %v193 = vrot.slane %v187, %v192
    %v211 = vunpack.c.l.b16 %v170
    %v212 = vunpack.c.l.b16 %v171
    %v213 = vunpack.c.l.b16 %v172
    %v214 = vunpack.c.l.b16 %v173
    %v215 = vunpack.c.l.b16 %v174
    %v216 = vunpack.c.l.b16 %v175
    %v217 = vunpack.c.l.b16 %v176
    %v218 = vunpack.c.l.b16 %v177
    %v219 = vunpack.c.l.b16 %v178
    %v220 = vunpack.c.l.b16 %v179
    %v221 = vunpack.c.l.b16 %v180
    %v222 = vunpack.c.l.b16 %v181
    %v223 = vunpack.c.l.b16 %v182
    %v224 = vunpack.c.l.b16 %v183
    %v225 = vunpack.c.l.b16 %v184
    %v226 = vunpack.c.l.b16 %v185
    %v227 = vpack.c.b16 %v212, %v211
    %v228 = vpack.c.b16 %v214, %v213
    %v229 = vpack.c.b16 %v216, %v215
    %v230 = vpack.c.b16 %v218, %v217
    %v231 = vpack.c.b16 %v220, %v219
    %v232 = vpack.c.b16 %v222, %v221
    %v233 = vpack.c.b16 %v224, %v223
    %v234 = vpack.c.b16 %v226, %v225
    %243 = vmatprep.subr.bf16.mxu0 0
    %244 = vmatpush1.bf16.msra.mxu0 %v234
    %245 = vmatprep.subr.bf16.mxu0 0
    %246 = vmatpush1.bf16.msra.mxu0 %v233
    %247 = vmatprep.subr.bf16.mxu0 0
    %248 = vmatpush1.bf16.msra.mxu0 %v232
    %249 = vmatprep.subr.bf16.mxu0 0
    %250 = vmatpush1.bf16.msra.mxu0 %v231
    %251 = vmatprep.subr.bf16.mxu0 0
    %252 = vmatpush1.bf16.msra.mxu0 %v230
    %253 = vmatprep.subr.bf16.mxu0 0
    %254 = vmatpush1.bf16.msra.mxu0 %v229
    %255 = vmatprep.subr.bf16.mxu0 0
    %256 = vmatpush1.bf16.msra.mxu0 %v228
    %257 = vmatprep.subr.bf16.mxu0 0
    %258 = vmatpush1.bf16.msra.mxu0 %v227
    %259 = vmatprep.subr.bf16.mxu0 0
    %260 = vmatpush2.bf16.msra.mxu0 0
    %261 = vmatprep.subr.bf16.mxu0 0
    %262 = vmatpush2.bf16.msra.mxu0 0
    %263 = vmatprep.subr.bf16.mxu0 0
    %264 = vmatpush2.bf16.msra.mxu0 0
    %265 = vmatprep.subr.bf16.mxu0 0
    %266 = vmatpush2.bf16.msra.mxu0 0
    %267 = vmatprep.subr.bf16.mxu0 0
    %268 = vmatpush2.bf16.msra.mxu0 0
    %269 = vmatprep.subr.bf16.mxu0 0
    %270 = vmatpush2.bf16.msra.mxu0 0
    %271 = vmatprep.subr.bf16.mxu0 0
    %272 = vmatpush2.bf16.msra.mxu0 0
    %273 = vmatprep.subr.bf16.mxu0 0
    %274 = vmatpush2.bf16.msra.mxu0 0
    %275 = vmatprep.mubr.bf16.mxu0 0
    %276 = vmatmul.mubr.bf16.gmra.mxu0 %v188
    %v277 = vpop.f32.mrf.mxu0
    %v278 = vadd.f32 %v193, %v277
    %v279 = vpop.f32.mrf.mxu0
    %v280 = vpop.f32.mrf.mxu0
    %v281 = vadd.f32 %v193, %v280
    %v282 = vpop.f32.mrf.mxu0
    %283 = vdwg.mxu0
    %v284 = vtanh.pop %v278
    %v285 = vtanh.pop %v281
    %v286 = vadd.f32 %v167, %v284
    %v287 = vadd.f32 %v168, %v285
    %288 = vadd.xlane.f32.xlu0 %v286
    %v289 = vpop.xlane.xlu0 %288
    %290 = vadd.xlane.f32.xlu0 %v287
    %v291 = vpop.xlane.xlu0 %290
    %v292 = vrcp.pop 128.0
    %v293 = vmul.f32 %v289, %v292
    %v294 = vmul.f32 %v291, %v292
    %v295 = vsub.f32 %v286, %v293
    %v296 = vsub.f32 %v287, %v294
    %v297 = vmul.f32 %v295, %v295
    %v298 = vmul.f32 %v296, %v296
    %299 = vadd.xlane.f32.xlu0 %v297
    %v300 = vpop.xlane.xlu0 %299
    %301 = vadd.xlane.f32.xlu0 %v298
    %v302 = vpop.xlane.xlu0 %301
    %v303 = vrcp.pop 127.0
    %v304 = vmul.f32 %v300, %v303
    %v305 = vmul.f32 %v302, %v303
    %v306 = vrsqrt.pop %v304
    %v307 = vmul.f32 %v304, %v306
    %vm308 = vcmp.eq.f32.partialorder %v304, inf
    %v309 = vsel %vm308, %v304, %v307
    %vm310 = vcmp.eq.f32.partialorder %v304, 0.0
    %v311 = vand.u32 %v304, 2147483648
    %v312 = vsel %vm310, %v311, %v309
    %v313 = vrsqrt.pop %v305
    %v314 = vmul.f32 %v305, %v313
    %vm315 = vcmp.eq.f32.partialorder %v305, inf
    %v316 = vsel %vm315, %v305, %v314
    %vm317 = vcmp.eq.f32.partialorder %v305, 0.0
    %v318 = vand.u32 %v305, 2147483648
    %v319 = vsel %vm317, %v318, %v316
    %v320 = vadd.f32 %v312, 1e-06
    %v321 = vadd.f32 %v319, 1e-06
    %v322 = vrcp.pop %v320
    %v323 = vmul.f32 1.0, %v322
    %v324 = vrcp.pop %v321
    %v325 = vmul.f32 1.0, %v324
    %v326 = vld [vmem:[%s3] sm:$0x1]
    %v328 = vlaneseq
    %v329 = vshrl.u32 %v328, 7
    %v330 = vsub.s32 0, %v329
    %v331 = vrot.slane %v326, %v330
    %v333 = vmul.f32 %v331, %v295
    %v334 = vmul.f32 %v331, %v296
    %v335 = vmul.f32 %v333, %v323
    %v336 = vmul.f32 %v334, %v325
    %v337 = vld [vmem:[%s4] sm:$0x1]
    %v339 = vlaneseq
    %v340 = vshrl.u32 %v339, 7
    %v341 = vsub.s32 0, %v340
    %v342 = vrot.slane %v337, %v341
    %v344 = vadd.f32 %v335, %v342
    %v345 = vadd.f32 %v336, %v342
    %346 = vst [vmem:[#allocation7] sm:$0xff] %v344
    %347 = vst [vmem:[#allocation7 + $0x8] sm:$0xff] %v345
    // Predicated region
    $region30: #{tpu_custom_call.1} parent=1 // pred_check
      _
    $region31: #{tpu_custom_call.1} parent=1 // pred_check_branch
      %349 = sbr.rel (0) target = $region33
    $region32: #{tpu_custom_call.1} parent=1 // pred_region
      %s351 = ssub.s32 256, 256
      %352 = vsyncadd [#allocation4], %s351
      %s353 = sshll.u32 [#allocation7], 4
      %s354 = int_to_ptr.vmem [resolvable:$true] %s353
      %359 = dma.vmem_to_hbm [thread:$0]  %s354, 256, %s5, [#allocation4], 128, 128, 8
    $region33: #{tpu_custom_call.1} parent=1 // pred_fallthru
      _
    // Predicated region
    $region34: #{tpu_custom_call.1} parent=1 // pred_check
      _
    $region35: #{tpu_custom_call.1} parent=1 // pred_check_branch
      %361 = sbr.rel (0) target = $region37
    $region36: #{tpu_custom_call.1} parent=1 // pred_region
      %362 = dma.done [#allocation4], 256
    $region37: #{tpu_custom_call.1} parent=1 // pred_fallthru
      _
    %363 = vsyncpa [#allocation3], 1
    %364 = vsyncpa [#allocation6], 1
    %365 = vsyncpa [#allocation4], 1

</llo_original>
